<compile_context>
chip_gen: v7x
topology: tpu7x:2x2x1
jax: 0.10.0
libtpu: 0.0.40
codegen_flags: <defaults>
</compile_context>

<pallas_src>
import functools

import jax
import jax.numpy as jnp
from jax.experimental import pallas as pl
from jax.experimental.pallas import tpu as pltpu


def _vq_kernel(x_ref, w_ref, w2_ref, q_ref, idx_ref, *, distance_dtype):
    # x_ref : (TN, D) block of flattened inputs (f32)
    # w_ref : (K, D)  full codebook (f32, resident across the grid)
    # w2_ref: (1, K)  precomputed sum(weight**2, axis=1)
    x = x_ref[...]
    w = w_ref[...]
    w2 = w2_ref[...]

    # x @ w^T on the MXU, contracting the last dim of both operands directly
    # (avoids an in-kernel transpose / relayout of the codebook tile).
    xw = jax.lax.dot_general(
        x.astype(distance_dtype), w.astype(distance_dtype),
        dimension_numbers=(((1,), (1,)), ((), ())),
        preferred_element_type=jnp.float32)                       # (TN, K)

    # ||x||^2 is constant per row and never affects the argmin -> omitted.
    scores = w2 - 2.0 * xw                                        # (TN, K)

    K = scores.shape[1]
    min_s = jnp.min(scores, axis=1, keepdims=True)
    col = jax.lax.broadcasted_iota(jnp.int32, scores.shape, 1)
    # first index achieving the minimum (matches torch.argmin first-occurrence)
    idx = jnp.min(jnp.where(scores == min_s, col, K), axis=1, keepdims=True)

    # one-hot stays in VMEM only; gather = one-hot @ codebook on the MXU (exact
    # in f32 since entries are 0/1).
    enc = (col == idx).astype(jnp.float32)                        # (TN, K)
    q_ref[...] = jnp.dot(enc, w, preferred_element_type=jnp.float32)
    idx_ref[...] = idx                                            # (TN, 1) int32


def vector_quantizer_forward(inputs, weight, commitment_cost,
                             fine_tuning=False, n=None,
                             block_rows=512, distance_dtype=jnp.float32):
    """Forward pass of Vector_Quantizer. Returns (loss, quantized, encodings).

    Set distance_dtype=jnp.bfloat16 on v6e/v7x to run the distance matmul on the
    bf16-native MXU (f32 accumulation); near-ties may then pick a different but
    equally-near code than the exact f32 path.
    """
    input_shape = inputs.shape
    K_codes, D = weight.shape
    inputs = inputs.astype(jnp.float32)
    weight = weight.astype(jnp.float32)

    flat = inputs.reshape(-1, D)
    N = flat.shape[0]

    # Clamp the tile to the (sublane-rounded) row count so tiny inputs do not
    # pay for a full 512-row tile of padding, then pad N up to a whole number
    # of tiles so every grid step uses the same MXU-friendly block shape.
    tile_rows = min(block_rows, ((N + 7) // 8) * 8)
    num_blocks = pl.cdiv(N, tile_rows)
    N_pad = num_blocks * tile_rows
    flat_padded = flat if N_pad == N else jnp.pad(flat, ((0, N_pad - N), (0, 0)))

    # Loop-invariant codebook norms, hoisted out of the kernel.
    w2 = jnp.sum(weight * weight, axis=1)[None, :]                # (1, K)

    kernel = functools.partial(_vq_kernel, distance_dtype=distance_dtype)

    q_flat, idx = pl.pallas_call(
        kernel,
        out_shape=(
            jax.ShapeDtypeStruct((N_pad, D), jnp.float32),
            jax.ShapeDtypeStruct((N_pad, 1), jnp.int32),
        ),
        grid_spec=pltpu.PrefetchScalarGridSpec(
            num_scalar_prefetch=0,
            grid=(num_blocks,),
            in_specs=[
                pl.BlockSpec((tile_rows, D), lambda i: (i, 0)),
                pl.BlockSpec((K_codes, D), lambda i: (0, 0)),
                pl.BlockSpec((1, K_codes), lambda i: (0, 0)),
            ],
            out_specs=[
                pl.BlockSpec((tile_rows, D), lambda i: (i, 0)),
                pl.BlockSpec((tile_rows, 1), lambda i: (i, 0)),
            ],
        ),
        compiler_params=pltpu.CompilerParams(
            dimension_semantics=("parallel",),
        ),
    )(flat_padded, weight, w2)

    q_flat = q_flat[:N]
    idx = idx[:N, 0]

    quantized = q_flat.reshape(input_shape)
    # Dense f32 one-hot encodings rebuilt outside the kernel (caller-facing only).
    encodings = jax.nn.one_hot(idx, K_codes, dtype=jnp.float32)

    if fine_tuning:
        # PyTorch: quantized[i, n[i]:K, ...] = 0 for i in range(len(n)),
        # applied BEFORE the losses.  Rows beyond len(n) are left untouched.
        Kdim = input_shape[1]
        batch = input_shape[0]
        n_arr = jnp.asarray(n, dtype=jnp.int32)
        if n_arr.shape[0] < batch:
            n_arr = jnp.concatenate(
                [n_arr, jnp.full((batch - n_arr.shape[0],), Kdim, jnp.int32)])
        row_idx = jnp.arange(Kdim, dtype=jnp.int32)
        mask = (row_idx[None, :] < n_arr[:, None]).astype(quantized.dtype)
        mask = mask.reshape(mask.shape + (1,) * (quantized.ndim - 2))
        quantized = quantized * mask

    # q_latent_loss + commitment_cost * e_latent_loss; both share the same
    # forward value mean((quantized - inputs)^2).
    mse = jnp.mean((quantized - inputs) ** 2)
    loss = (1.0 + commitment_cost) * mse
    # TODO(synk): forward-only. Reproducing PyTorch training gradients (separate
    # detach paths for q_latent vs e_latent) would need a jax.custom_vjp wrapper.

    # straight-through estimator: forward value equals `quantized`
    st_quantized = inputs + jax.lax.stop_gradient(quantized - inputs)
    return loss, st_quantized, encodings


def _reference_forward(inputs, weight, commitment_cost):
    """Pure-jnp reference mirroring the PyTorch forward (fine_tuning=False)."""
    D = weight.shape[1]
    flat = inputs.reshape(-1, D)
    dist = (jnp.sum(flat ** 2, axis=1, keepdims=True)
            + jnp.sum(weight ** 2, axis=1)[None, :]
            - 2.0 * jnp.dot(flat, weight.T, precision=jax.lax.Precision.HIGHEST))
    idx = jnp.argmin(dist, axis=1)
    enc = jax.nn.one_hot(idx, weight.shape[0], dtype=jnp.float32)
    q = jnp.dot(enc, weight,
                precision=jax.lax.Precision.HIGHEST).reshape(inputs.shape)
    mse = jnp.mean((q - inputs) ** 2)
    return (1.0 + commitment_cost) * mse, q, enc


if __name__ == "__main__":
    num_embeddings = 256
    embedding_dim = 128
    commitment_cost = 0.25

    key = jax.random.PRNGKey(0)
    k_w, k_x = jax.random.split(key)

    # nn.Embedding weight init: uniform(-1/num_embeddings, 1/num_embeddings)
    weight = jax.random.uniform(
        k_w, (num_embeddings, embedding_dim), dtype=jnp.float32,
        minval=-1.0 / num_embeddings, maxval=1.0 / num_embeddings)

    # inputs: (batch, K, embedding_dim) as implied by the fine-tuning indexing
    x = jax.random.normal(k_x, (2, 8, embedding_dim), dtype=jnp.float32) * 0.01

    loss, quantized, encodings = vector_quantizer_forward(
        x, weight, commitment_cost, fine_tuning=False)
    jax.block_until_ready((loss, quantized, encodings))

    # correctness check against pure-JAX reference (exact f32 distance path)
    ref_loss, ref_q, ref_enc = _reference_forward(x, weight, commitment_cost)
    assert jnp.allclose(loss, ref_loss, rtol=1e-5, atol=1e-9), (loss, ref_loss)
    assert jnp.allclose(quantized, ref_q, atol=1e-6)
    assert jnp.allclose(encodings, ref_enc)

    # exercise the fine_tuning branch once
    ft_loss, ft_q, _ = vector_quantizer_forward(
        x, weight, commitment_cost, fine_tuning=True, n=[3, 5])
    jax.block_until_ready((ft_loss, ft_q))
    assert bool(jnp.isfinite(ft_loss))

    # exercise the bf16 distance-matmul fast path (v6e/v7x); no strict
    # tie-break assertion since near-ties may legitimately differ from f32
    bf_loss, bf_q, bf_enc = vector_quantizer_forward(
        x, weight, commitment_cost, distance_dtype=jnp.bfloat16)
    jax.block_until_ready((bf_loss, bf_q, bf_enc))
    assert bool(jnp.isfinite(bf_loss))

    print("KERNEL_OK")
</pallas_src>

<mosaic_0001>
module attributes {stable_mosaic.version = 11 : i64} {
  func.func @_vq_kernel(%arg0: i32, %arg1: memref<16x128xf32, #tpu.memory_space<vmem>>, %arg2: memref<256x128xf32, #tpu.memory_space<vmem>>, %arg3: memref<1x256xf32, #tpu.memory_space<vmem>>, %arg4: memref<16x128xf32, #tpu.memory_space<vmem>>, %arg5: memref<16x1xi32, #tpu.memory_space<vmem>>) attributes {dimension_semantics = [#tpu.dimension_semantics<parallel>], iteration_bounds = array<i64: 1>, scalar_prefetch = 0 : i64, scratch_operands = 0 : i64, tpu.core_type = #tpu.core_type<tc>, window_params = [{transform_indices = @transform_0, window_bounds = array<i64: 16, 128>}, {pipeline_mode = #tpu.pipeline_mode<synchronous>, transform_indices = @transform_1, window_bounds = array<i64: 256, 128>}, {pipeline_mode = #tpu.pipeline_mode<synchronous>, transform_indices = @transform_2, window_bounds = array<i64: 1, 256>}, {transform_indices = @transform_3, window_bounds = array<i64: 16, 128>}, {transform_indices = @transform_4, window_bounds = array<i64: 16, 1>}]} {
    %c0 = arith.constant 0 : index
    %c0_0 = arith.constant 0 : index
    %0 = vector.load %arg1[%c0, %c0_0] : memref<16x128xf32, #tpu.memory_space<vmem>>, vector<16x128xf32>
    %c0_1 = arith.constant 0 : index
    %c0_2 = arith.constant 0 : index
    %1 = vector.load %arg2[%c0_1, %c0_2] : memref<256x128xf32, #tpu.memory_space<vmem>>, vector<256x128xf32>
    %c0_3 = arith.constant 0 : index
    %c0_4 = arith.constant 0 : index
    %2 = vector.load %arg3[%c0_3, %c0_4] : memref<1x256xf32, #tpu.memory_space<vmem>>, vector<1x256xf32>
    %cst = arith.constant dense<0.000000e+00> : vector<16x256xf32>
    %3 = tpu.matmul %0, %1, %cst {dimension_numbers = #tpu.dot_dimension_numbers<[1], [1], [0], [0], [0, 0, 1, 0], [], []>} : vector<16x128xf32>, vector<256x128xf32>, vector<16x256xf32> -> vector<16x256xf32>
    %cst_5 = arith.constant 2.000000e+00 : f32
    %4 = vector.broadcast %cst_5 : f32 to vector<16x256xf32>
    %5 = arith.mulf %4, %3 : vector<16x256xf32>
    %6 = vector.broadcast %2 : vector<1x256xf32> to vector<16x256xf32>
    %7 = arith.subf %6, %5 : vector<16x256xf32>
    %cst_6 = arith.constant dense<0x7F800000> : vector<16xf32>
    %8 = vector.multi_reduction <minimumf>, %7, %cst_6 [1] : vector<16x256xf32> to vector<16xf32>
    %9 = vector.shape_cast %8 : vector<16xf32> to vector<16x1xf32>
    %10 = tpu.iota {dimensions = array<i32: 1>} : vector<16x256xi32>
    %11 = vector.broadcast %9 : vector<16x1xf32> to vector<16x256xf32>
    %12 = arith.cmpf oeq, %7, %11 : vector<16x256xf32>
    %c256_i32 = arith.constant 256 : i32
    %13 = vector.broadcast %c256_i32 : i32 to vector<16x256xi32>
    %14 = arith.select %12, %10, %13 : vector<16x256xi1>, vector<16x256xi32>
    %cst_7 = arith.constant dense<2147483647> : vector<16xi32>
    %15 = vector.multi_reduction <minsi>, %14, %cst_7 [1] : vector<16x256xi32> to vector<16xi32>
    %16 = vector.shape_cast %15 : vector<16xi32> to vector<16x1xi32>
    %17 = vector.broadcast %16 : vector<16x1xi32> to vector<16x256xi32>
    %18 = arith.cmpi eq, %10, %17 : vector<16x256xi32>
    %19 = arith.extui %18 : vector<16x256xi1> to vector<16x256xi32>
    %20 = arith.sitofp %19 : vector<16x256xi32> to vector<16x256xf32>
    %cst_8 = arith.constant dense<0.000000e+00> : vector<16x128xf32>
    %21 = tpu.matmul %20, %1, %cst_8 {dimension_numbers = #tpu.dot_dimension_numbers<[1], [0], [0], [1], [0, 0, 1, 1], [], []>} : vector<16x256xf32>, vector<256x128xf32>, vector<16x128xf32> -> vector<16x128xf32>
    %c0_9 = arith.constant 0 : index
    %c0_10 = arith.constant 0 : index
    %22 = vector.load %arg4[%c0_9, %c0_10] : memref<16x128xf32, #tpu.memory_space<vmem>>, vector<16x128xf32>
    tpu.vector_store %arg4[%c0_9, %c0_10], %21 {strides = array<i32>} : memref<16x128xf32, #tpu.memory_space<vmem>>, vector<16x128xf32>,
    %c0_11 = arith.constant 0 : index
    %c0_12 = arith.constant 0 : index
    %23 = vector.load %arg5[%c0_11, %c0_12] : memref<16x1xi32, #tpu.memory_space<vmem>>, vector<16x1xi32>
    tpu.vector_store %arg5[%c0_11, %c0_12], %16 {strides = array<i32>} : memref<16x1xi32, #tpu.memory_space<vmem>>, vector<16x1xi32>,
    return
  }
  func.func @transform_0(%arg0: i32) -> (i32, i32) {
    %c0_i32 = arith.constant 0 : i32
    %c0_i32_0 = arith.constant 0 : i32
    return %arg0, %c0_i32 : i32, i32
  }
  func.func @transform_1(%arg0: i32) -> (i32, i32) {
    %c0_i32 = arith.constant 0 : i32
    %c0_i32_0 = arith.constant 0 : i32
    %c0_i32_1 = arith.constant 0 : i32
    return %c0_i32, %c0_i32_0 : i32, i32
  }
  func.func @transform_2(%arg0: i32) -> (i32, i32) {
    %c0_i32 = arith.constant 0 : i32
    %c0_i32_0 = arith.constant 0 : i32
    %c0_i32_1 = arith.constant 0 : i32
    return %c0_i32, %c0_i32_0 : i32, i32
  }
  func.func @transform_3(%arg0: i32) -> (i32, i32) {
    %c0_i32 = arith.constant 0 : i32
    %c0_i32_0 = arith.constant 0 : i32
    return %arg0, %c0_i32 : i32, i32
  }
  func.func @transform_4(%arg0: i32) -> (i32, i32) {
    %c0_i32 = arith.constant 0 : i32
    %c0_i32_0 = arith.constant 0 : i32
    return %arg0, %c0_i32 : i32, i32
  }
}

</mosaic_0001>

<llo_original>
// kernel: tpu_custom_call.1
$region0: #{tpu_custom_call.1}
  #allocation0 [shape = 'u32[]', space=smem, size = 0x4, offset = 0x4, fixed_abs, tag = 'smem constant byte address 0x4 - core index']
  #allocation1 [shape = 'u32[144,128]{1,0:T(1,128)}', space=vmem, size = 0x12000, scoped, tag = 'internal scratch']
  %s0 = inlined_call_operand.hbm [shape: f32[16,128], index: 0, kind: input, shape index: {}]
  %s1 = inlined_call_operand.hbm [shape: f32[256,128], index: 1, kind: input, shape index: {}]
  %s2 = inlined_call_operand.vmem [shape: f32[1,256], index: 2, kind: input, shape index: {}]
  %s3 = inlined_call_operand.hbm [shape: f32[16,128], index: 3, kind: output, shape index: {0}]
  %s4 = inlined_call_operand.vmem [shape: s32[16,1], index: 4, kind: output, shape index: {1}]
  %5 = xla_tuple %s3, %s4
  %s6 = sld [smem:[#allocation0]]
  $region38: #{tpu_custom_call.1} parent=0
    _
  %s8 = ssub.s32 1, %s6
  %s9 = scalar_select 0, %s8, %s6
  $region1: #{tpu_custom_call.1} parent=0
    #allocation2 [shape = 'u8[8192]{0}', space=vmem, size = 0x2000, scoped, tag = 'input window, operand 0, single buffered']
    #allocation3 [shape = 's32[1]{0}', space=sflag, size = 0x4, scoped, tag = 'scoped memory for tpu_custom_call.1']
    #allocation4 [shape = 's32[1]{0}', space=sflag, size = 0x4, scoped, tag = 'scoped memory for tpu_custom_call.1']
    #allocation5 [shape = 'u8[131072]{0}', space=vmem, size = 0x20000, scoped, tag = 'input window, operand 1, single buffered']
    #allocation6 [shape = 's32[1]{0}', space=sflag, size = 0x4, scoped, tag = 'scoped memory for tpu_custom_call.1']
    #allocation7 [shape = 'u8[8192]{0}', space=vmem, size = 0x2000, scoped, tag = 'output window, operand 0, single buffered']
    %10 = vsyncpa [#allocation3], 0
    %11 = vsyncpa [#allocation6], 0
    %12 = vsyncpa [#allocation4], 0
    // Predicated region
    $region2: #{tpu_custom_call.1} parent=1 // pred_check
      _
    $region3: #{tpu_custom_call.1} parent=1 // pred_check_branch
      %14 = sbr.rel (0) target = $region5
    $region4: #{tpu_custom_call.1} parent=1 // pred_region
      %s16 = ssub.s32 256, 256
      %17 = vsyncadd [#allocation3], %s16
      %s18 = sshll.u32 [#allocation2], 4
      %s19 = int_to_ptr.vmem [resolvable:$true] %s18
      %24 = dma.hbm_to_vmem [thread:$0]  %s0, 256, %s19, [#allocation3], 128, 128, 8
    $region5: #{tpu_custom_call.1} parent=1 // pred_fallthru
      _
    // Predicated region
    $region6: #{tpu_custom_call.1} parent=1 // pred_check
      _
    $region7: #{tpu_custom_call.1} parent=1 // pred_check_branch
      %26 = sbr.rel (0) target = $region9
    $region8: #{tpu_custom_call.1} parent=1 // pred_region
      %s28 = ssub.s32 4096, 4096
      %29 = vsyncadd [#allocation6], %s28
      %s30 = sshll.u32 [#allocation5], 4
      %s31 = int_to_ptr.vmem [resolvable:$true] %s30
      %36 = dma.hbm_to_vmem [thread:$0]  %s1, 4096, %s31, [#allocation6], 128, 128, 8
    $region9: #{tpu_custom_call.1} parent=1 // pred_fallthru
      _
    // Predicated region
    $region10: #{tpu_custom_call.1} parent=1 // pred_check
      _
    $region11: #{tpu_custom_call.1} parent=1 // pred_check_branch
      %38 = sbr.rel (0) target = $region13
    $region12: #{tpu_custom_call.1} parent=1 // pred_region
      _
    $region13: #{tpu_custom_call.1} parent=1 // pred_fallthru
      _
    // Predicated region
    $region14: #{tpu_custom_call.1} parent=1 // pred_check
      _
    $region15: #{tpu_custom_call.1} parent=1 // pred_check_branch
      %40 = sbr.rel (0) target = $region17
    $region16: #{tpu_custom_call.1} parent=1 // pred_region
      %41 = dma.done [#allocation3], 256
    $region17: #{tpu_custom_call.1} parent=1 // pred_fallthru
      _
    // Predicated region
    $region18: #{tpu_custom_call.1} parent=1 // pred_check
      _
    $region19: #{tpu_custom_call.1} parent=1 // pred_check_branch
      %43 = sbr.rel (0) target = $region21
    $region20: #{tpu_custom_call.1} parent=1 // pred_region
      %44 = dma.done [#allocation6], 4096
    $region21: #{tpu_custom_call.1} parent=1 // pred_fallthru
      _
    %v45 = vld [vmem:[#allocation2] sm:$0xff]
    %v46 = vld [vmem:[#allocation2 + $0x8] sm:$0xff]
    %v47 = vld [vmem:[#allocation5] sm:$0xff]
    %v48 = vld [vmem:[#allocation5 + $0x8] sm:$0xff]
    %v49 = vld [vmem:[#allocation5 + $0x10] sm:$0xff]
    %v50 = vld [vmem:[#allocation5 + $0x18] sm:$0xff]
    %v51 = vld [vmem:[#allocation5 + $0x20] sm:$0xff]
    %v52 = vld [vmem:[#allocation5 + $0x28] sm:$0xff]
    %v53 = vld [vmem:[#allocation5 + $0x30] sm:$0xff]
    %v54 = vld [vmem:[#allocation5 + $0x38] sm:$0xff]
    %v55 = vld [vmem:[#allocation5 + $0x40] sm:$0xff]
    %v56 = vld [vmem:[#allocation5 + $0x48] sm:$0xff]
    %v57 = vld [vmem:[#allocation5 + $0x50] sm:$0xff]
    %v58 = vld [vmem:[#allocation5 + $0x58] sm:$0xff]
    %v59 = vld [vmem:[#allocation5 + $0x60] sm:$0xff]
    %v60 = vld [vmem:[#allocation5 + $0x68] sm:$0xff]
    %v61 = vld [vmem:[#allocation5 + $0x70] sm:$0xff]
    %v62 = vld [vmem:[#allocation5 + $0x78] sm:$0xff]
    %v63 = vld [vmem:[#allocation5 + $0x80] sm:$0xff]
    %v64 = vld [vmem:[#allocation5 + $0x88] sm:$0xff]
    %v65 = vld [vmem:[#allocation5 + $0x90] sm:$0xff]
    %v66 = vld [vmem:[#allocation5 + $0x98] sm:$0xff]
    %v67 = vld [vmem:[#allocation5 + $0xa0] sm:$0xff]
    %v68 = vld [vmem:[#allocation5 + $0xa8] sm:$0xff]
    %v69 = vld [vmem:[#allocation5 + $0xb0] sm:$0xff]
    %v70 = vld [vmem:[#allocation5 + $0xb8] sm:$0xff]
    %v71 = vld [vmem:[#allocation5 + $0xc0] sm:$0xff]
    %v72 = vld [vmem:[#allocation5 + $0xc8] sm:$0xff]
    %v73 = vld [vmem:[#allocation5 + $0xd0] sm:$0xff]
    %v74 = vld [vmem:[#allocation5 + $0xd8] sm:$0xff]
    %v75 = vld [vmem:[#allocation5 + $0xe0] sm:$0xff]
    %v76 = vld [vmem:[#allocation5 + $0xe8] sm:$0xff]
    %v77 = vld [vmem:[#allocation5 + $0xf0] sm:$0xff]
    %v78 = vld [vmem:[#allocation5 + $0xf8] sm:$0xff]
    %v79 = vld [vmem:[%s2] sm:$0x3]
    %80 = vmatprep.subr.mxu0 0.0
    %81 = vmatpush1.xpose.msra.mxu0 %v47
    %82 = vmatprep.subr.mxu0 0.0
    %83 = vmatpush1.xpose.msra.mxu0 %v48
    %84 = vmatprep.subr.mxu0 0.0
    %85 = vmatpush1.xpose.msra.mxu0 %v49
    %86 = vmatprep.subr.mxu0 0.0
    %87 = vmatpush1.xpose.msra.mxu0 %v50
    %88 = vmatprep.subr.mxu0 0.0
    %89 = vmatpush1.xpose.msra.mxu0 %v51
    %90 = vmatprep.subr.mxu0 0.0
    %91 = vmatpush1.xpose.msra.mxu0 %v52
    %92 = vmatprep.subr.mxu0 0.0
    %93 = vmatpush1.xpose.msra.mxu0 %v53
    %94 = vmatprep.subr.mxu0 0.0
    %95 = vmatpush1.xpose.msra.mxu0 %v54
    %96 = vmatprep.subr.mxu0 0.0
    %97 = vmatpush1.xpose.msra.mxu0 %v55
    %98 = vmatprep.subr.mxu0 0.0
    %99 = vmatpush1.xpose.msra.mxu0 %v56
    %100 = vmatprep.subr.mxu0 0.0
    %101 = vmatpush1.xpose.msra.mxu0 %v57
    %102 = vmatprep.subr.mxu0 0.0
    %103 = vmatpush1.xpose.msra.mxu0 %v58
    %104 = vmatprep.subr.mxu0 0.0
    %105 = vmatpush1.xpose.msra.mxu0 %v59
    %106 = vmatprep.subr.mxu0 0.0
    %107 = vmatpush1.xpose.msra.mxu0 %v60
    %108 = vmatprep.subr.mxu0 0.0
    %109 = vmatpush1.xpose.msra.mxu0 %v61
    %110 = vmatprep.subr.mxu0 0.0
    %111 = vmatpush1.xpose.msra.mxu0 %v62
    %112 = vmatprep.subr.mxu0 0.0
    %113 = vmatpush1.xpose.msra.mxu0 %v63
    %114 = vmatprep.subr.mxu0 0.0
    %115 = vmatpush1.xpose.msra.mxu0 %v64
    %116 = vmatprep.subr.mxu0 0.0
    %117 = vmatpush1.xpose.msra.mxu0 %v65
    %118 = vmatprep.subr.mxu0 0.0
    %119 = vmatpush1.xpose.msra.mxu0 %v66
    %120 = vmatprep.subr.mxu0 0.0
    %121 = vmatpush1.xpose.msra.mxu0 %v67
    %122 = vmatprep.subr.mxu0 0.0
    %123 = vmatpush1.xpose.msra.mxu0 %v68
    %124 = vmatprep.subr.mxu0 0.0
    %125 = vmatpush1.xpose.msra.mxu0 %v69
    %126 = vmatprep.subr.mxu0 0.0
    %127 = vmatpush1.xpose.msra.mxu0 %v70
    %128 = vmatprep.subr.mxu0 0.0
    %129 = vmatpush1.xpose.msra.mxu0 %v71
    %130 = vmatprep.subr.mxu0 0.0
    %131 = vmatpush1.xpose.msra.mxu0 %v72
    %132 = vmatprep.subr.mxu0 0.0
    %133 = vmatpush1.xpose.msra.mxu0 %v73
    %134 = vmatprep.subr.mxu0 0.0
    %135 = vmatpush1.xpose.msra.mxu0 %v74
    %136 = vmatprep.subr.mxu0 0.0
    %137 = vmatpush1.xpose.msra.mxu0 %v75
    %138 = vmatprep.subr.mxu0 0.0
    %139 = vmatpush1.xpose.msra.mxu0 %v76
    %140 = vmatprep.subr.mxu0 0.0
    %141 = vmatpush1.xpose.msra.mxu0 %v77
    %142 = vmatprep.subr.mxu0 0.0
    %143 = vmatpush1.xpose.msra.mxu0 %v78
    %144 = vmatprep.mubr.f32.mxu0 0.0
    %145 = vmatmul.mubr.f32.gmra.mrb[0].mxu0 %v45
    %v146 = vpop.f32.mrb[0].mxu0
    %v147 = vadd.f32 0.0, %v146
    %v148 = vpop.f32.mrb[0].mxu0
    %v149 = vadd.f32 0.0, %v148
    %150 = vmatprep.mubr.f32.mxu0 0.0
    %151 = vmatmul.mubr.f32.gmra.mrb[0].mxu0 %v46
    %v152 = vpop.f32.mrb[0].mxu0
    %v153 = vadd.f32 0.0, %v152
    %v154 = vpop.f32.mrb[0].mxu0
    %v155 = vadd.f32 0.0, %v154
    %156 = vdwg.mxu0
    %v157 = vmul.f32 %v147, 2.0
    %v158 = vmul.f32 %v149, 2.0
    %v159 = vmul.f32 %v153, 2.0
    %v160 = vmul.f32 %v155, 2.0
    %v162 = vlaneseq
    %v163 = vshrl.u32 %v162, 7
    %v164 = vsub.s32 0, %v163
    %v165 = vrot.slane %v79, %v164
    %v166 = vlaneseq
    %v167 = vshrl.u32 %v166, 7
    %v168 = vsub.s32 1, %v167
    %v169 = vrot.slane %v79, %v168
    %v172 = vsub.f32 %v165, %v157
    %v173 = vsub.f32 %v169, %v158
    %v174 = vsub.f32 %v165, %v159
    %v175 = vsub.f32 %v169, %v160
    %v176 = vmin.f32 %v172, %v173
    %177 = vmin.xlane.f32.xlu0 %v176
    %v178 = vpop.xlane.xlu0 %177
    %v179 = vmin.f32 %v174, %v175
    %180 = vmin.xlane.f32.xlu0 %v179
    %v181 = vpop.xlane.xlu0 %180
    %v182 = vlaneseq
    %v183 = vand.u32 %v182, 127
    %v184 = vadd.s32 %v183, 128
    %vm185 = vcmp.eq.f32.partialorder %v172, %v178
    %vm186 = vcmp.eq.f32.partialorder %v173, %v178
    %vm187 = vcmp.eq.f32.partialorder %v174, %v181
    %vm188 = vcmp.eq.f32.partialorder %v175, %v181
    %v189 = vsel %vm185, %v183, 256
    %v190 = vsel %vm186, %v184, 256
    %v191 = vsel %vm187, %v183, 256
    %v192 = vsel %vm188, %v184, 256
    %vm193 = vcmp.lt.s32.totalorder %v189, %v190
    %v194 = vsel %vm193, %v189, %v190
    %v195 = vand.u32 %v194, 65535
    %v196 = vshra.s32 %v194, 16
    %v197 = vcvt.s32.f32 %v195
    %v198 = vcvt.s32.f32 %v196
    %199 = vmin.xlane.f32.xlu0 %v198
    %v200 = vpop.xlane.xlu0 %199
    %vm201 = vcmp.eq.f32.partialorder %v198, %v200
    %v202 = vsel %vm201, %v197, inf
    %203 = vmin.xlane.f32.xlu0 %v202
    %v204 = vpop.xlane.xlu0 %203
    %v205 = vcvt.f32.s32 %v204
    %v206 = vcvt.f32.s32 %v200
    %v207 = vshll.u32 %v206, 16
    %v208 = vadd.s32 %v207, %v205
    %vm209 = vcmp.lt.s32.totalorder %v191, %v192
    %v210 = vsel %vm209, %v191, %v192
    %v211 = vand.u32 %v210, 65535
    %v212 = vshra.s32 %v210, 16
    %v213 = vcvt.s32.f32 %v211
    %v214 = vcvt.s32.f32 %v212
    %215 = vmin.xlane.f32.xlu0 %v214
    %v216 = vpop.xlane.xlu0 %215
    %vm217 = vcmp.eq.f32.partialorder %v214, %v216
    %v218 = vsel %vm217, %v213, inf
    %219 = vmin.xlane.f32.xlu0 %v218
    %v220 = vpop.xlane.xlu0 %219
    %v221 = vcvt.f32.s32 %v220
    %v222 = vcvt.f32.s32 %v216
    %v223 = vshll.u32 %v222, 16
    %v224 = vadd.s32 %v223, %v221
    %vm225 = vcmp.eq.s32.totalorder %v183, %v208
    %vm226 = vcmp.eq.s32.totalorder %v184, %v208
    %vm227 = vcmp.eq.s32.totalorder %v183, %v224
    %vm228 = vcmp.eq.s32.totalorder %v184, %v224
    %v229 = vsel %vm225, 1, 0
    %v230 = vsel %vm226, 1, 0
    %v231 = vsel %vm227, 1, 0
    %v232 = vsel %vm228, 1, 0
    %v233 = vcvt.s32.f32 %v229
    %v234 = vcvt.s32.f32 %v230
    %v235 = vcvt.s32.f32 %v231
    %v236 = vcvt.s32.f32 %v232
    %237 = vmatprep.subr.mxu0 0.0
    %238 = vmatpush1.msra.mxu0 %v47
    %239 = vmatprep.subr.mxu0 0.0
    %240 = vmatpush1.msra.mxu0 %v48
    %241 = vmatprep.subr.mxu0 0.0
    %242 = vmatpush1.msra.mxu0 %v49
    %243 = vmatprep.subr.mxu0 0.0
    %244 = vmatpush1.msra.mxu0 %v50
    %245 = vmatprep.subr.mxu0 0.0
    %246 = vmatpush1.msra.mxu0 %v51
    %247 = vmatprep.subr.mxu0 0.0
    %248 = vmatpush1.msra.mxu0 %v52
    %249 = vmatprep.subr.mxu0 0.0
    %250 = vmatpush1.msra.mxu0 %v53
    %251 = vmatprep.subr.mxu0 0.0
    %252 = vmatpush1.msra.mxu0 %v54
    %253 = vmatprep.subr.mxu0 0.0
    %254 = vmatpush1.msra.mxu0 %v55
    %255 = vmatprep.subr.mxu0 0.0
    %256 = vmatpush1.msra.mxu0 %v56
    %257 = vmatprep.subr.mxu0 0.0
    %258 = vmatpush1.msra.mxu0 %v57
    %259 = vmatprep.subr.mxu0 0.0
    %260 = vmatpush1.msra.mxu0 %v58
    %261 = vmatprep.subr.mxu0 0.0
    %262 = vmatpush1.msra.mxu0 %v59
    %263 = vmatprep.subr.mxu0 0.0
    %264 = vmatpush1.msra.mxu0 %v60
    %265 = vmatprep.subr.mxu0 0.0
    %266 = vmatpush1.msra.mxu0 %v61
    %267 = vmatprep.subr.mxu0 0.0
    %268 = vmatpush1.msra.mxu0 %v62
    %269 = vmatprep.subr.mxu0 0.0
    %270 = vmatpush1.msra.mxu0 %v63
    %271 = vmatprep.subr.mxu0 0.0
    %272 = vmatpush1.msra.mxu0 %v64
    %273 = vmatprep.subr.mxu0 0.0
    %274 = vmatpush1.msra.mxu0 %v65
    %275 = vmatprep.subr.mxu0 0.0
    %276 = vmatpush1.msra.mxu0 %v66
    %277 = vmatprep.subr.mxu0 0.0
    %278 = vmatpush1.msra.mxu0 %v67
    %279 = vmatprep.subr.mxu0 0.0
    %280 = vmatpush1.msra.mxu0 %v68
    %281 = vmatprep.subr.mxu0 0.0
    %282 = vmatpush1.msra.mxu0 %v69
    %283 = vmatprep.subr.mxu0 0.0
    %284 = vmatpush1.msra.mxu0 %v70
    %285 = vmatprep.subr.mxu0 0.0
    %286 = vmatpush1.msra.mxu0 %v71
    %287 = vmatprep.subr.mxu0 0.0
    %288 = vmatpush1.msra.mxu0 %v72
    %289 = vmatprep.subr.mxu0 0.0
    %290 = vmatpush1.msra.mxu0 %v73
    %291 = vmatprep.subr.mxu0 0.0
    %292 = vmatpush1.msra.mxu0 %v74
    %293 = vmatprep.subr.mxu0 0.0
    %294 = vmatpush1.msra.mxu0 %v75
    %295 = vmatprep.subr.mxu0 0.0
    %296 = vmatpush1.msra.mxu0 %v76
    %297 = vmatprep.subr.mxu0 0.0
    %298 = vmatpush1.msra.mxu0 %v77
    %299 = vmatprep.subr.mxu0 0.0
    %300 = vmatpush1.msra.mxu0 %v78
    %301 = vmatprep.mubr.f32.mxu0 %v234
    %302 = vmatmul.mubr.f32.gmra.mrb[0].mxu0 %v233
    %v303 = vpop.f32.mrb[0].mxu0
    %v304 = vadd.f32 0.0, %v303
    %v305 = vpop.f32.mrb[0].mxu0
    %306 = vmatprep.mubr.f32.mxu0 %v236
    %307 = vmatmul.mubr.f32.gmra.mrb[0].mxu0 %v235
    %v308 = vpop.f32.mrb[0].mxu0
    %v309 = vadd.f32 0.0, %v308
    %v310 = vpop.f32.mrb[0].mxu0
    %311 = vdwg.mxu0
    %312 = vst [vmem:[#allocation7] sm:$0xff] %v304
    %313 = vst [vmem:[#allocation7 + $0x8] sm:$0xff] %v309
    %vm314 = vcmask 7168
    %315 = vst.msk [vmem:[%s4] sm:$0xff] %vm314, %v208
    %316 = vst.msk [vmem:[%s4 + $0x8] sm:$0xff] %vm314, %v224
    // Predicated region
    $region22: #{tpu_custom_call.1} parent=1 // pred_check
      _
    $region23: #{tpu_custom_call.1} parent=1 // pred_check_branch
      %318 = sbr.rel (0) target = $region25
    $region24: #{tpu_custom_call.1} parent=1 // pred_region
      %s320 = ssub.s32 256, 256
      %321 = vsyncadd [#allocation4], %s320
      %s322 = sshll.u32 [#allocation7], 4
      %s323 = int_to_ptr.vmem [resolvable:$true] %s322
      %328 = dma.vmem_to_hbm [thread:$0]  %s323, 256, %s3, [#allocation4], 128, 128, 8
    $region25: #{tpu_custom_call.1} parent=1 // pred_fallthru
      _
    // Predicated region
    $region26: #{tpu_custom_call.1} parent=1 // pred_check
      _
    $region27: #{tpu_custom_call.1} parent=1 // pred_check_branch
      %330 = sbr.rel (0) target = $region29
    $region28: #{tpu_custom_call.1} parent=1 // pred_region
      _
    $region29: #{tpu_custom_call.1} parent=1 // pred_fallthru
      _
    // Predicated region
    $region30: #{tpu_custom_call.1} parent=1 // pred_check
      _
    $region31: #{tpu_custom_call.1} parent=1 // pred_check_branch
      %332 = sbr.rel (0) target = $region33
    $region32: #{tpu_custom_call.1} parent=1 // pred_region
      %333 = dma.done [#allocation4], 256
    $region33: #{tpu_custom_call.1} parent=1 // pred_fallthru
      _
    // Predicated region
    $region34: #{tpu_custom_call.1} parent=1 // pred_check
      _
    $region35: #{tpu_custom_call.1} parent=1 // pred_check_branch
      %335 = sbr.rel (0) target = $region37
    $region36: #{tpu_custom_call.1} parent=1 // pred_region
      _
    $region37: #{tpu_custom_call.1} parent=1 // pred_fallthru
      _
    %336 = vsyncpa [#allocation3], 1
    %337 = vsyncpa [#allocation6], 1
    %338 = vsyncpa [#allocation4], 1

</llo_original>
